<compile_context>
chip_gen: v5e
topology: v5e:2x2
jax: 0.10.0
libtpu: 0.0.40
codegen_flags: <defaults>
</compile_context>

<pallas_src>
import functools

import jax
import jax.numpy as jnp
from jax.experimental import pallas as pl
from jax.experimental.pallas import tpu as pltpu


# ---------------------------------------------------------------------------
# Fused kernel: whole loss in one invocation (batch fully VMEM-resident).
# ---------------------------------------------------------------------------
def _loss_mnp_kernel(anc_ref, vec_ref, pre_ref, out_ref,
                     *, n_anchors, batch, T, m1, lambda_kl, beta):
    K = n_anchors
    bf = float(batch)

    # ---- packed, lane-dense operands (batch on the 128-lane axis) --------
    ap = anc_ref[0:K, :]          # (K, B) sim_anchor_pos
    an = anc_ref[K:2 * K, :]      # (K, B) sim_anchor_neg
    rp = vec_ref[0:1, :]          # (1, B) recon_pos
    sp = vec_ref[1:2, :]          # (1, B) score_pos
    rn = vec_ref[2:3, :]          # (1, B) recon_neg
    sn = vec_ref[3:4, :]          # (1, B) score_neg

    # ---- pass 1: negative-branch statistics ------------------------------
    max_neg = jnp.max(an, axis=0, keepdims=True)             # (1, B)
    w_raw = jax.nn.sigmoid(beta * max_neg)                   # un-normalised neg weight
    inv_col = 1.0 / jnp.sum(an, axis=0, keepdims=True)       # (1, B) reciprocal bcast
    rsim = an * inv_col                                      # (K, B), cols sum to 1

    sum_w = jnp.sum(w_raw, axis=1, keepdims=True)            # (1, 1)
    inv_sum_w = 1.0 / sum_w
    sum_wr = jnp.sum(w_raw * rn, axis=1, keepdims=True)
    sum_ws = jnp.sum(w_raw * sn * sn, axis=1, keepdims=True)
    sum_wm = jnp.sum(w_raw * max_neg, axis=1, keepdims=True)
    sum_spmse = jnp.sum((sp - 1.0) ** 2, axis=1, keepdims=True)
    sum_maxp = jnp.sum(jnp.max(ap, axis=0, keepdims=True), axis=1, keepdims=True)
    f_anc = jnp.sum(rsim, axis=1, keepdims=True)             # (K, 1)

    # ---- reconstruction losses --------------------------------------------
    # (recon_neg * neg_weight).mean() == sum(w_raw*recon_neg) / sum(w_raw)
    l_recon_neg = sum_wr * inv_sum_w                          # (1, 1)
    relu_term = jnp.maximum(-rp + l_recon_neg + m1, 0.0)      # (1, B)
    l_recon_pos = jnp.sum(relu_term, axis=1, keepdims=True) / bf
    l_recon = l_recon_neg + l_recon_pos

    # ---- score losses (score_loss='mse') -----------------------------------
    l_score_pos = sum_spmse / bf
    l_score_neg = sum_ws * inv_sum_w
    l_score = l_score_pos + l_score_neg

    # ---- anchor loss: KL(rtarget || rsim) via one-log algebra --------------
    #   rtarget = rsim^2 / (f_anc * S),  S = sum_k rsim^2 / f_anc
    #   log(rtarget) - log(rsim) = log(rsim) - log(f_anc) - log(S)
    inv_f = 1.0 / f_anc                                       # (K, 1)
    target_d = rsim * rsim * inv_f                            # (K, B)
    s_col = jnp.sum(target_d, axis=0, keepdims=True)          # (1, B)
    rtarget = target_d * (1.0 / s_col)                        # (K, B)
    log_term = jnp.log(rsim) - jnp.log(f_anc) - jnp.log(s_col)
    kl = jnp.sum(jnp.sum(rtarget * log_term, axis=1, keepdims=True),
                 axis=0, keepdims=True)                        # (1, 1)

    max_pos_mean = sum_maxp / bf
    max_neg_mean = sum_wm * inv_sum_w
    l_anchor = (-jnp.log(jax.nn.sigmoid(-max_pos_mean + max_neg_mean))
                + lambda_kl * kl)

    # ---- exp-based task weighting (k = 0 when previous loss == 0) ----------
    def _k(l, idx):
        pre = jnp.full((1, 1), pre_ref[idx], dtype=jnp.float32)
        nz = pre != 0.0
        safe = jnp.where(nz, pre, 1.0)
        return jnp.where(nz, jnp.exp(l / safe / T), jnp.zeros_like(l))

    k1 = _k(l_recon, 0)
    k2 = _k(l_score, 1)
    k3 = _k(l_anchor, 2)
    ks = k1 + k2 + k3          # all pre_* == 0 -> NaN (matches reference)
    loss = (k1 * l_recon + k2 * l_score + k3 * l_anchor) / ks

    # ---- pack the 10 scalar results into one lane-dense row ----------------
    vals = (loss, l_recon, l_recon_pos, l_recon_neg,
            l_score, l_score_pos, l_score_neg,
            l_anchor, max_pos_mean, max_neg_mean)
    lane = jax.lax.broadcasted_iota(jnp.int32, (1, 128), 1)
    packed = jnp.zeros((1, 128), jnp.float32)
    for j, v in enumerate(vals):       # static unroll: 10 selects on one vreg
        packed = jnp.where(lane == j, v, packed)
    out_ref[...] = packed


# ---------------------------------------------------------------------------
# Wrapper: Loss_MNP.forward on precomputed basenet outputs.
# ---------------------------------------------------------------------------
def loss_mnp_pallas(recon_pos, score_pos, sim_anchor_pos,
                    recon_neg, score_neg, sim_anchor_neg,
                    pre_recon_loss, pre_score_loss, pre_anchor_loss,
                    *, T=2, m1=0.02, lambda_kl=1.0, beta=1.0):
    f32 = jnp.float32
    B, K = sim_anchor_neg.shape

    # Single-shot VMEM footprint ~ (2K+6)*4 bytes per sample.  Keep well under
    # v7x's 32 MiB scoped default (64 MiB physical; v5e/v6e have 128 MiB).
    vmem_need = 4 * (2 * K + 6) * B + (1 << 16)
    assert vmem_need <= 24 * 1024 * 1024, (
        "batch too large for the single-shot kernel; "
        "TODO(synk): add a tiled grid variant for very large B")

    # Pack operands lane-dense (batch on the 128-lane axis).
    anc = jnp.concatenate(
        [jnp.asarray(sim_anchor_pos, f32), jnp.asarray(sim_anchor_neg, f32)],
        axis=1).T                                            # (2K, B)
    vec = jnp.stack([jnp.asarray(recon_pos, f32),
                     jnp.asarray(score_pos, f32),
                     jnp.asarray(recon_neg, f32),
                     jnp.asarray(score_neg, f32)], axis=0)    # (4, B)
    pre = jnp.stack([jnp.asarray(pre_recon_loss, f32),
                     jnp.asarray(pre_score_loss, f32),
                     jnp.asarray(pre_anchor_loss, f32)])      # (3,)

    out = pl.pallas_call(
        functools.partial(_loss_mnp_kernel, n_anchors=K, batch=B,
                          T=float(T), m1=float(m1),
                          lambda_kl=float(lambda_kl), beta=float(beta)),
        in_specs=[pl.BlockSpec(memory_space=pltpu.MemorySpace.VMEM),
                  pl.BlockSpec(memory_space=pltpu.MemorySpace.VMEM),
                  pl.BlockSpec(memory_space=pltpu.MemorySpace.SMEM)],
        out_specs=pl.BlockSpec(memory_space=pltpu.MemorySpace.VMEM),
        out_shape=jax.ShapeDtypeStruct((1, 128), f32),
        compiler_params=pltpu.CompilerParams(
            vmem_limit_bytes=32 * 1024 * 1024),
        cost_estimate=pl.CostEstimate(
            flops=int(B * (10 * K + 40)),
            transcendentals=int(B * (K + 2) + 2 * K + 10),
            bytes_accessed=int(4 * ((2 * K + 4) * B + 3 + 128))),
    )(anc, vec, pre)

    loss = out[0, 0]
    l_recon, l_recon_pos, l_recon_neg = out[0, 1], out[0, 2], out[0, 3]
    l_score, l_score_pos, l_score_neg = out[0, 4], out[0, 5], out[0, 6]
    l_anchor, max_pos_mean, max_neg_mean = out[0, 7], out[0, 8], out[0, 9]
    return (loss,
            (l_recon, l_recon_pos, l_recon_neg),
            (l_score, l_score_pos, l_score_neg),
            (l_anchor, max_pos_mean, max_neg_mean))


def loss_mnp(basenet, x_pos, x_neg, pre_recon_loss, pre_score_loss, pre_anchor_loss,
             *, T=2, m1=0.02, lambda_kl=1.0, beta=1.0):
    """Full module forward: basenet (external, plain JAX glue) + Pallas loss."""
    recon_pos, score_pos, sim_pos = basenet(x_pos)
    recon_neg, score_neg, sim_neg = basenet(x_neg)
    return loss_mnp_pallas(recon_pos, score_pos, sim_pos,
                           recon_neg, score_neg, sim_neg,
                           pre_recon_loss, pre_score_loss, pre_anchor_loss,
                           T=T, m1=m1, lambda_kl=lambda_kl, beta=beta)


# ---------------------------------------------------------------------------
# Pure-JAX reference (mirrors the PyTorch forward, score_loss='mse').
# ---------------------------------------------------------------------------
def loss_mnp_ref(recon_pos, score_pos, sim_pos, recon_neg, score_neg, sim_neg,
                 pre_recon, pre_score, pre_anchor,
                 *, T=2, m1=0.02, lambda_kl=1.0, beta=1.0):
    n = sim_neg.shape[0]
    neg_w = jax.nn.sigmoid(beta * jnp.max(sim_neg, axis=1))
    neg_w = neg_w / jnp.sum(neg_w) * n
    loss_recon_neg = jnp.mean(recon_neg * neg_w)
    loss_recon_pos = jnp.mean(jnp.maximum(-recon_pos + loss_recon_neg + m1, 0.0))
    loss_recon = loss_recon_neg + loss_recon_pos
    loss_score_pos = (score_pos - 1.0) ** 2
    loss_score_neg = (score_neg - 0.0) ** 2
    loss_score = jnp.mean(loss_score_pos) + jnp.mean(loss_score_neg * neg_w)
    rsim = sim_neg / jnp.sum(sim_neg, axis=1, keepdims=True)
    f_anchors = jnp.sum(rsim, axis=0, keepdims=True)
    target_d = jnp.square(rsim) / f_anchors
    rtarget = target_d / jnp.sum(target_d, axis=1, keepdims=True)
    loss_kl = jnp.sum(rtarget * (jnp.log(rtarget) - jnp.log(rsim)))
    max_pos_mean = jnp.mean(jnp.max(sim_pos, axis=1))
    max_neg_mean = jnp.mean(neg_w * jnp.max(sim_neg, axis=1))
    loss_anchor = -jnp.log(jax.nn.sigmoid(-max_pos_mean + max_neg_mean)) + lambda_kl * loss_kl

    def _k(l, pre):
        safe = jnp.where(pre != 0.0, pre, 1.0)
        return jnp.where(pre != 0.0, jnp.exp(l / safe / T), 0.0)

    k1, k2, k3 = _k(loss_recon, pre_recon), _k(loss_score, pre_score), _k(loss_anchor, pre_anchor)
    ks = k1 + k2 + k3
    loss = k1 / ks * loss_recon + k2 / ks * loss_score + k3 / ks * loss_anchor
    return (loss,
            (loss_recon, loss_recon_pos, loss_recon_neg),
            (loss_score, jnp.mean(loss_score_pos), jnp.mean(loss_score_neg * neg_w)),
            (loss_anchor, max_pos_mean, max_neg_mean))


def make_basenet(key, in_dim, n_anchors):
    """Deterministic stand-in for the external basenet (plain JAX glue)."""
    k1, k2, k3 = jax.random.split(key, 3)
    w_rec = 0.2 * jax.random.normal(k1, (in_dim, in_dim), jnp.float32)
    w_sco = 0.7 * jax.random.normal(k2, (in_dim, 1), jnp.float32)
    w_anc = 0.7 * jax.random.normal(k3, (in_dim, n_anchors), jnp.float32)

    def basenet(x):
        recon = jnp.mean((x - x @ w_rec) ** 2, axis=1)       # [B]   > 0
        score = jax.nn.sigmoid(x @ w_sco)[:, 0]              # [B]   in (0,1)
        sim = jax.nn.sigmoid(x @ w_anc) + 0.05               # [B,K] > 0
        return recon, score, sim

    return basenet


if __name__ == "__main__":
    key = jax.random.PRNGKey(0)
    k_net, k_pos, k_neg = jax.random.split(key, 3)

    B, in_dim, K = 256, 8, 4
    basenet = make_basenet(k_net, in_dim, K)
    x_pos = jax.random.normal(k_pos, (B, in_dim), jnp.float32)
    x_neg = jax.random.normal(k_neg, (B, in_dim), jnp.float32)

    rp, sp, ap = basenet(x_pos)
    rn, sn, an = basenet(x_neg)

    test_cases = [
        (jnp.float32(0.9), jnp.float32(0.6), jnp.float32(1.4)),   # normal path
        (jnp.float32(0.9), jnp.float32(0.0), jnp.float32(1.4)),   # pre_score == 0 branch
    ]
    for pre_r, pre_s, pre_a in test_cases:
        out = loss_mnp_pallas(rp, sp, ap, rn, sn, an, pre_r, pre_s, pre_a)
        out = jax.block_until_ready(out)
        ref = loss_mnp_ref(rp, sp, ap, rn, sn, an, pre_r, pre_s, pre_a)
        got_leaves = jax.tree_util.tree_leaves(out)
        ref_leaves = jax.tree_util.tree_leaves(ref)
        assert len(got_leaves) == len(ref_leaves) == 10
        for idx, (g, r) in enumerate(zip(got_leaves, ref_leaves)):
            assert jnp.allclose(g, r, rtol=5e-4, atol=5e-5), (idx, g, r)

    print("KERNEL_OK")
</pallas_src>

<mosaic_0001>
module attributes {stable_mosaic.version = 11 : i64} {
  func.func @_loss_mnp_kernel(%arg0: memref<8x256xf32, #tpu.memory_space<vmem>>, %arg1: memref<4x256xf32, #tpu.memory_space<vmem>>, %arg2: memref<3xf32, #tpu.memory_space<smem>>, %arg3: memref<1x128xf32, #tpu.memory_space<vmem>>) attributes {dimension_semantics = [], scalar_prefetch = 0 : i64, scratch_operands = 0 : i64, tpu.core_type = #tpu.core_type<tc>} {
    %c0 = arith.constant 0 : index
    %c0_0 = arith.constant 0 : index
    %0 = vector.load %arg0[%c0, %c0_0] : memref<8x256xf32, #tpu.memory_space<vmem>>, vector<4x256xf32>
    %c4 = arith.constant 4 : index
    %c0_1 = arith.constant 0 : index
    %1 = vector.load %arg0[%c4, %c0_1] : memref<8x256xf32, #tpu.memory_space<vmem>>, vector<4x256xf32>
    %c0_2 = arith.constant 0 : index
    %c0_3 = arith.constant 0 : index
    %2 = vector.load %arg1[%c0_2, %c0_3] : memref<4x256xf32, #tpu.memory_space<vmem>>, vector<1x256xf32>
    %c1 = arith.constant 1 : index
    %c0_4 = arith.constant 0 : index
    %3 = vector.load %arg1[%c1, %c0_4] : memref<4x256xf32, #tpu.memory_space<vmem>>, vector<1x256xf32>
    %c2 = arith.constant 2 : index
    %c0_5 = arith.constant 0 : index
    %4 = vector.load %arg1[%c2, %c0_5] : memref<4x256xf32, #tpu.memory_space<vmem>>, vector<1x256xf32>
    %c3 = arith.constant 3 : index
    %c0_6 = arith.constant 0 : index
    %5 = vector.load %arg1[%c3, %c0_6] : memref<4x256xf32, #tpu.memory_space<vmem>>, vector<1x256xf32>
    %cst = arith.constant dense<0xFF800000> : vector<256xf32>
    %6 = vector.multi_reduction <maximumf>, %1, %cst [0] : vector<4x256xf32> to vector<256xf32>
    %7 = vector.shape_cast %6 : vector<256xf32> to vector<1x256xf32>
    %cst_7 = arith.constant 1.000000e+00 : f32
    %8 = vector.broadcast %cst_7 : f32 to vector<1x256xf32>
    %9 = arith.mulf %8, %7 : vector<1x256xf32>
    %10 = arith.negf %9 : vector<1x256xf32>
    %11 = math.exp %10 : vector<1x256xf32>
    %cst_8 = arith.constant 1.000000e+00 : f32
    %12 = vector.broadcast %cst_8 : f32 to vector<1x256xf32>
    %13 = arith.addf %12, %11 : vector<1x256xf32>
    %14 = arith.divf %12, %13 : vector<1x256xf32>
    %cst_9 = arith.constant dense<0.000000e+00> : vector<256xf32>
    %15 = vector.multi_reduction <add>, %1, %cst_9 [0] : vector<4x256xf32> to vector<256xf32>
    %16 = vector.shape_cast %15 : vector<256xf32> to vector<1x256xf32>
    %cst_10 = arith.constant 1.000000e+00 : f32
    %17 = vector.broadcast %cst_10 : f32 to vector<1x256xf32>
    %18 = arith.divf %17, %16 : vector<1x256xf32>
    %19 = vector.broadcast %18 : vector<1x256xf32> to vector<4x256xf32>
    %20 = arith.mulf %1, %19 : vector<4x256xf32>
    %cst_11 = arith.constant dense<0.000000e+00> : vector<1xf32>
    %21 = vector.multi_reduction <add>, %14, %cst_11 [1] : vector<1x256xf32> to vector<1xf32>
    %22 = vector.shape_cast %21 : vector<1xf32> to vector<1x1xf32>
    %cst_12 = arith.constant 1.000000e+00 : f32
    %23 = vector.broadcast %cst_12 : f32 to vector<1x1xf32>
    %24 = arith.divf %23, %22 : vector<1x1xf32>
    %25 = arith.mulf %14, %4 : vector<1x256xf32>
    %cst_13 = arith.constant dense<0.000000e+00> : vector<1xf32>
    %26 = vector.multi_reduction <add>, %25, %cst_13 [1] : vector<1x256xf32> to vector<1xf32>
    %27 = vector.shape_cast %26 : vector<1xf32> to vector<1x1xf32>
    %28 = arith.mulf %14, %5 : vector<1x256xf32>
    %29 = arith.mulf %28, %5 : vector<1x256xf32>
    %cst_14 = arith.constant dense<0.000000e+00> : vector<1xf32>
    %30 = vector.multi_reduction <add>, %29, %cst_14 [1] : vector<1x256xf32> to vector<1xf32>
    %31 = vector.shape_cast %30 : vector<1xf32> to vector<1x1xf32>
    %32 = arith.mulf %14, %7 : vector<1x256xf32>
    %cst_15 = arith.constant dense<0.000000e+00> : vector<1xf32>
    %33 = vector.multi_reduction <add>, %32, %cst_15 [1] : vector<1x256xf32> to vector<1xf32>
    %34 = vector.shape_cast %33 : vector<1xf32> to vector<1x1xf32>
    %cst_16 = arith.constant 1.000000e+00 : f32
    %35 = vector.broadcast %cst_16 : f32 to vector<1x256xf32>
    %36 = arith.subf %3, %35 : vector<1x256xf32>
    %37 = arith.mulf %36, %36 : vector<1x256xf32>
    %cst_17 = arith.constant dense<0.000000e+00> : vector<1xf32>
    %38 = vector.multi_reduction <add>, %37, %cst_17 [1] : vector<1x256xf32> to vector<1xf32>
    %39 = vector.shape_cast %38 : vector<1xf32> to vector<1x1xf32>
    %cst_18 = arith.constant dense<0xFF800000> : vector<256xf32>
    %40 = vector.multi_reduction <maximumf>, %0, %cst_18 [0] : vector<4x256xf32> to vector<256xf32>
    %41 = vector.shape_cast %40 : vector<256xf32> to vector<1x256xf32>
    %cst_19 = arith.constant dense<0.000000e+00> : vector<1xf32>
    %42 = vector.multi_reduction <add>, %41, %cst_19 [1] : vector<1x256xf32> to vector<1xf32>
    %43 = vector.shape_cast %42 : vector<1xf32> to vector<1x1xf32>
    %cst_20 = arith.constant dense<0.000000e+00> : vector<4xf32>
    %44 = vector.multi_reduction <add>, %20, %cst_20 [1] : vector<4x256xf32> to vector<4xf32>
    %45 = vector.shape_cast %44 : vector<4xf32> to vector<4x1xf32>
    %46 = arith.mulf %27, %24 : vector<1x1xf32>
    %cst_21 = arith.constant 0.000000e+00 : f32
    %47 = vector.broadcast %cst_21 : f32 to vector<1x256xf32>
    %48 = arith.subf %47, %2 : vector<1x256xf32>
    %49 = vector.broadcast %46 : vector<1x1xf32> to vector<1x256xf32>
    %50 = arith.addf %48, %49 : vector<1x256xf32>
    %cst_22 = arith.constant 2.000000e-02 : f32
    %51 = vector.broadcast %cst_22 : f32 to vector<1x256xf32>
    %52 = arith.addf %50, %51 : vector<1x256xf32>
    %cst_23 = arith.constant 0.000000e+00 : f32
    %53 = vector.broadcast %cst_23 : f32 to vector<1x256xf32>
    %54 = arith.maximumf %52, %53 : vector<1x256xf32>
    %cst_24 = arith.constant dense<0.000000e+00> : vector<1xf32>
    %55 = vector.multi_reduction <add>, %54, %cst_24 [1] : vector<1x256xf32> to vector<1xf32>
    %56 = vector.shape_cast %55 : vector<1xf32> to vector<1x1xf32>
    %cst_25 = arith.constant 2.560000e+02 : f32
    %57 = vector.broadcast %cst_25 : f32 to vector<1x1xf32>
    %58 = arith.divf %56, %57 : vector<1x1xf32>
    %59 = arith.addf %46, %58 : vector<1x1xf32>
    %cst_26 = arith.constant 2.560000e+02 : f32
    %60 = vector.broadcast %cst_26 : f32 to vector<1x1xf32>
    %61 = arith.divf %39, %60 : vector<1x1xf32>
    %62 = arith.mulf %31, %24 : vector<1x1xf32>
    %63 = arith.addf %61, %62 : vector<1x1xf32>
    %cst_27 = arith.constant 1.000000e+00 : f32
    %64 = vector.broadcast %cst_27 : f32 to vector<4x1xf32>
    %65 = arith.divf %64, %45 : vector<4x1xf32>
    %66 = arith.mulf %20, %20 : vector<4x256xf32>
    %67 = vector.broadcast %65 : vector<4x1xf32> to vector<4x256xf32>
    %68 = arith.mulf %66, %67 : vector<4x256xf32>
    %cst_28 = arith.constant dense<0.000000e+00> : vector<256xf32>
    %69 = vector.multi_reduction <add>, %68, %cst_28 [0] : vector<4x256xf32> to vector<256xf32>
    %70 = vector.shape_cast %69 : vector<256xf32> to vector<1x256xf32>
    %cst_29 = arith.constant 1.000000e+00 : f32
    %71 = vector.broadcast %cst_29 : f32 to vector<1x256xf32>
    %72 = arith.divf %71, %70 : vector<1x256xf32>
    %73 = vector.broadcast %72 : vector<1x256xf32> to vector<4x256xf32>
    %74 = arith.mulf %68, %73 : vector<4x256xf32>
    %75 = math.log %20 : vector<4x256xf32>
    %76 = math.log %45 : vector<4x1xf32>
    %77 = vector.broadcast %76 : vector<4x1xf32> to vector<4x256xf32>
    %78 = arith.subf %75, %77 : vector<4x256xf32>
    %79 = math.log %70 : vector<1x256xf32>
    %80 = vector.broadcast %79 : vector<1x256xf32> to vector<4x256xf32>
    %81 = arith.subf %78, %80 : vector<4x256xf32>
    %82 = arith.mulf %74, %81 : vector<4x256xf32>
    %cst_30 = arith.constant dense<0.000000e+00> : vector<4xf32>
    %83 = vector.multi_reduction <add>, %82, %cst_30 [1] : vector<4x256xf32> to vector<4xf32>
    %84 = vector.shape_cast %83 : vector<4xf32> to vector<4x1xf32>
    %cst_31 = arith.constant dense<0.000000e+00> : vector<1xf32>
    %85 = vector.multi_reduction <add>, %84, %cst_31 [0] : vector<4x1xf32> to vector<1xf32>
    %86 = vector.shape_cast %85 : vector<1xf32> to vector<1x1xf32>
    %cst_32 = arith.constant 2.560000e+02 : f32
    %87 = vector.broadcast %cst_32 : f32 to vector<1x1xf32>
    %88 = arith.divf %43, %87 : vector<1x1xf32>
    %89 = arith.mulf %34, %24 : vector<1x1xf32>
    %cst_33 = arith.constant 0.000000e+00 : f32
    %90 = vector.broadcast %cst_33 : f32 to vector<1x1xf32>
    %91 = arith.subf %90, %88 : vector<1x1xf32>
    %92 = arith.addf %91, %89 : vector<1x1xf32>
    %93 = arith.negf %92 : vector<1x1xf32>
    %94 = math.exp %93 : vector<1x1xf32>
    %cst_34 = arith.constant 1.000000e+00 : f32
    %95 = vector.broadcast %cst_34 : f32 to vector<1x1xf32>
    %96 = arith.addf %95, %94 : vector<1x1xf32>
    %97 = arith.divf %95, %96 : vector<1x1xf32>
    %98 = math.log %97 : vector<1x1xf32>
    %cst_35 = arith.constant 0.000000e+00 : f32
    %99 = vector.broadcast %cst_35 : f32 to vector<1x1xf32>
    %100 = arith.subf %99, %98 : vector<1x1xf32>
    %cst_36 = arith.constant 1.000000e+00 : f32
    %101 = vector.broadcast %cst_36 : f32 to vector<1x1xf32>
    %102 = arith.mulf %101, %86 : vector<1x1xf32>
    %103 = arith.addf %100, %102 : vector<1x1xf32>
    %c0_37 = arith.constant 0 : index
    %104 = memref.load %arg2[%c0_37] : memref<3xf32, #tpu.memory_space<smem>>
    %105 = vector.broadcast %104 : f32 to vector<1x1xf32>
    %cst_38 = arith.constant 0.000000e+00 : f32
    %106 = vector.broadcast %cst_38 : f32 to vector<1x1xf32>
    %107 = arith.cmpf one, %105, %106 : vector<1x1xf32>
    %cst_39 = arith.constant 1.000000e+00 : f32
    %108 = vector.broadcast %cst_39 : f32 to vector<1x1xf32>
    %109 = arith.select %107, %105, %108 : vector<1x1xi1>, vector<1x1xf32>
    %110 = arith.divf %59, %109 : vector<1x1xf32>
    %cst_40 = arith.constant 2.000000e+00 : f32
    %111 = vector.broadcast %cst_40 : f32 to vector<1x1xf32>
    %112 = arith.divf %110, %111 : vector<1x1xf32>
    %113 = math.exp %112 : vector<1x1xf32>
    %cst_41 = arith.constant 0.000000e+00 : f32
    %114 = vector.broadcast %cst_41 : f32 to vector<1x1xf32>
    %115 = arith.select %107, %113, %114 : vector<1x1xi1>, vector<1x1xf32>
    %c1_42 = arith.constant 1 : index
    %116 = memref.load %arg2[%c1_42] : memref<3xf32, #tpu.memory_space<smem>>
    %117 = vector.broadcast %116 : f32 to vector<1x1xf32>
    %cst_43 = arith.constant 0.000000e+00 : f32
    %118 = vector.broadcast %cst_43 : f32 to vector<1x1xf32>
    %119 = arith.cmpf one, %117, %118 : vector<1x1xf32>
    %cst_44 = arith.constant 1.000000e+00 : f32
    %120 = vector.broadcast %cst_44 : f32 to vector<1x1xf32>
    %121 = arith.select %119, %117, %120 : vector<1x1xi1>, vector<1x1xf32>
    %122 = arith.divf %63, %121 : vector<1x1xf32>
    %cst_45 = arith.constant 2.000000e+00 : f32
    %123 = vector.broadcast %cst_45 : f32 to vector<1x1xf32>
    %124 = arith.divf %122, %123 : vector<1x1xf32>
    %125 = math.exp %124 : vector<1x1xf32>
    %cst_46 = arith.constant 0.000000e+00 : f32
    %126 = vector.broadcast %cst_46 : f32 to vector<1x1xf32>
    %127 = arith.select %119, %125, %126 : vector<1x1xi1>, vector<1x1xf32>
    %c2_47 = arith.constant 2 : index
    %128 = memref.load %arg2[%c2_47] : memref<3xf32, #tpu.memory_space<smem>>
    %129 = vector.broadcast %128 : f32 to vector<1x1xf32>
    %cst_48 = arith.constant 0.000000e+00 : f32
    %130 = vector.broadcast %cst_48 : f32 to vector<1x1xf32>
    %131 = arith.cmpf one, %129, %130 : vector<1x1xf32>
    %cst_49 = arith.constant 1.000000e+00 : f32
    %132 = vector.broadcast %cst_49 : f32 to vector<1x1xf32>
    %133 = arith.select %131, %129, %132 : vector<1x1xi1>, vector<1x1xf32>
    %134 = arith.divf %103, %133 : vector<1x1xf32>
    %cst_50 = arith.constant 2.000000e+00 : f32
    %135 = vector.broadcast %cst_50 : f32 to vector<1x1xf32>
    %136 = arith.divf %134, %135 : vector<1x1xf32>
    %137 = math.exp %136 : vector<1x1xf32>
    %cst_51 = arith.constant 0.000000e+00 : f32
    %138 = vector.broadcast %cst_51 : f32 to vector<1x1xf32>
    %139 = arith.select %131, %137, %138 : vector<1x1xi1>, vector<1x1xf32>
    %140 = arith.addf %115, %127 : vector<1x1xf32>
    %141 = arith.addf %140, %139 : vector<1x1xf32>
    %142 = arith.mulf %115, %59 : vector<1x1xf32>
    %143 = arith.mulf %127, %63 : vector<1x1xf32>
    %144 = arith.addf %142, %143 : vector<1x1xf32>
    %145 = arith.mulf %139, %103 : vector<1x1xf32>
    %146 = arith.addf %144, %145 : vector<1x1xf32>
    %147 = arith.divf %146, %141 : vector<1x1xf32>
    %148 = tpu.iota {dimensions = array<i32: 1>} : vector<1x128xi32>
    %cst_52 = arith.constant 0.000000e+00 : f32
    %149 = vector.broadcast %cst_52 : f32 to vector<1x128xf32>
    %c0_i32 = arith.constant 0 : i32
    %150 = vector.broadcast %c0_i32 : i32 to vector<1x128xi32>
    %151 = arith.cmpi eq, %148, %150 : vector<1x128xi32>
    %152 = vector.shape_cast %147 : vector<1x1xf32> to vector<1x1xf32>
    %153 = vector.broadcast %152 : vector<1x1xf32> to vector<1x128xf32>
    %154 = arith.select %151, %153, %149 : vector<1x128xi1>, vector<1x128xf32>
    %c1_i32 = arith.constant 1 : i32
    %155 = vector.broadcast %c1_i32 : i32 to vector<1x128xi32>
    %156 = arith.cmpi eq, %148, %155 : vector<1x128xi32>
    %157 = vector.shape_cast %59 : vector<1x1xf32> to vector<1x1xf32>
    %158 = vector.broadcast %157 : vector<1x1xf32> to vector<1x128xf32>
    %159 = arith.select %156, %158, %154 : vector<1x128xi1>, vector<1x128xf32>
    %c2_i32 = arith.constant 2 : i32
    %160 = vector.broadcast %c2_i32 : i32 to vector<1x128xi32>
    %161 = arith.cmpi eq, %148, %160 : vector<1x128xi32>
    %162 = vector.shape_cast %58 : vector<1x1xf32> to vector<1x1xf32>
    %163 = vector.broadcast %162 : vector<1x1xf32> to vector<1x128xf32>
    %164 = arith.select %161, %163, %159 : vector<1x128xi1>, vector<1x128xf32>
    %c3_i32 = arith.constant 3 : i32
    %165 = vector.broadcast %c3_i32 : i32 to vector<1x128xi32>
    %166 = arith.cmpi eq, %148, %165 : vector<1x128xi32>
    %167 = vector.shape_cast %46 : vector<1x1xf32> to vector<1x1xf32>
    %168 = vector.broadcast %167 : vector<1x1xf32> to vector<1x128xf32>
    %169 = arith.select %166, %168, %164 : vector<1x128xi1>, vector<1x128xf32>
    %c4_i32 = arith.constant 4 : i32
    %170 = vector.broadcast %c4_i32 : i32 to vector<1x128xi32>
    %171 = arith.cmpi eq, %148, %170 : vector<1x128xi32>
    %172 = vector.shape_cast %63 : vector<1x1xf32> to vector<1x1xf32>
    %173 = vector.broadcast %172 : vector<1x1xf32> to vector<1x128xf32>
    %174 = arith.select %171, %173, %169 : vector<1x128xi1>, vector<1x128xf32>
    %c5_i32 = arith.constant 5 : i32
    %175 = vector.broadcast %c5_i32 : i32 to vector<1x128xi32>
    %176 = arith.cmpi eq, %148, %175 : vector<1x128xi32>
    %177 = vector.shape_cast %61 : vector<1x1xf32> to vector<1x1xf32>
    %178 = vector.broadcast %177 : vector<1x1xf32> to vector<1x128xf32>
    %179 = arith.select %176, %178, %174 : vector<1x128xi1>, vector<1x128xf32>
    %c6_i32 = arith.constant 6 : i32
    %180 = vector.broadcast %c6_i32 : i32 to vector<1x128xi32>
    %181 = arith.cmpi eq, %148, %180 : vector<1x128xi32>
    %182 = vector.shape_cast %62 : vector<1x1xf32> to vector<1x1xf32>
    %183 = vector.broadcast %182 : vector<1x1xf32> to vector<1x128xf32>
    %184 = arith.select %181, %183, %179 : vector<1x128xi1>, vector<1x128xf32>
    %c7_i32 = arith.constant 7 : i32
    %185 = vector.broadcast %c7_i32 : i32 to vector<1x128xi32>
    %186 = arith.cmpi eq, %148, %185 : vector<1x128xi32>
    %187 = vector.shape_cast %103 : vector<1x1xf32> to vector<1x1xf32>
    %188 = vector.broadcast %187 : vector<1x1xf32> to vector<1x128xf32>
    %189 = arith.select %186, %188, %184 : vector<1x128xi1>, vector<1x128xf32>
    %c8_i32 = arith.constant 8 : i32
    %190 = vector.broadcast %c8_i32 : i32 to vector<1x128xi32>
    %191 = arith.cmpi eq, %148, %190 : vector<1x128xi32>
    %192 = vector.shape_cast %88 : vector<1x1xf32> to vector<1x1xf32>
    %193 = vector.broadcast %192 : vector<1x1xf32> to vector<1x128xf32>
    %194 = arith.select %191, %193, %189 : vector<1x128xi1>, vector<1x128xf32>
    %c9_i32 = arith.constant 9 : i32
    %195 = vector.broadcast %c9_i32 : i32 to vector<1x128xi32>
    %196 = arith.cmpi eq, %148, %195 : vector<1x128xi32>
    %197 = vector.shape_cast %89 : vector<1x1xf32> to vector<1x1xf32>
    %198 = vector.broadcast %197 : vector<1x1xf32> to vector<1x128xf32>
    %199 = arith.select %196, %198, %194 : vector<1x128xi1>, vector<1x128xf32>
    %c0_53 = arith.constant 0 : index
    %c0_54 = arith.constant 0 : index
    %200 = vector.load %arg3[%c0_53, %c0_54] : memref<1x128xf32, #tpu.memory_space<vmem>>, vector<1x128xf32>
    tpu.vector_store %arg3[%c0_53, %c0_54], %199 {strides = array<i32>} : memref<1x128xf32, #tpu.memory_space<vmem>>, vector<1x128xf32>,
    return
  }
}

</mosaic_0001>

<llo_original>
// kernel: tpu_custom_call.1
$region0: #{tpu_custom_call.1}
  #allocation0 [shape = 'u32[]', space=smem, size = 0x4, offset = 0x4, fixed_abs, tag = 'smem constant byte address 0x4 - core index']
  #allocation1 [shape = 'u32[72,128]{1,0:T(1,128)}', space=vmem, size = 0x9000, scoped, tag = 'internal scratch']
  %s0 = inlined_call_operand.hbm [shape: f32[8,256], index: 0, kind: input, shape index: {}]
  %s1 = inlined_call_operand.hbm [shape: f32[4,256], index: 1, kind: input, shape index: {}]
  %s2 = inlined_call_operand.vmem [shape: f32[3], index: 2, kind: input, shape index: {}]
  %s3 = inlined_call_operand.hbm [shape: f32[1,128], index: 3, kind: output, shape index: {}]
  %s4 = sld [smem:[#allocation0]]
  $region34: #{tpu_custom_call.1} parent=0
    _
  %s6 = ssub.s32 1, %s4
  %s7 = scalar_select 0, %s6, %s4
  $region1: #{tpu_custom_call.1} parent=0
    #allocation2 [shape = 'u8[8192]{0}', space=vmem, size = 0x2000, scoped, tag = 'input window, operand 0, single buffered']
    #allocation3 [shape = 's32[1]{0}', space=sflag, size = 0x4, scoped, tag = 'scoped memory for tpu_custom_call.1']
    #allocation4 [shape = 's32[1]{0}', space=sflag, size = 0x4, scoped, tag = 'scoped memory for tpu_custom_call.1']
    #allocation5 [shape = 's32[1]{0}', space=sflag, size = 0x4, scoped, tag = 'scoped memory for tpu_custom_call.1']
    #allocation6 [shape = 'u8[4096]{0}', space=vmem, size = 0x1000, scoped, tag = 'input window, operand 1, single buffered']
    #allocation7 [shape = 's32[1]{0}', space=sflag, size = 0x4, scoped, tag = 'scoped memory for tpu_custom_call.1']
    #allocation8 [shape = 'u8[512]{0}', space=smem, size = 0x200, scoped, tag = 'input window, operand 2, single buffered']
    #allocation9 [shape = 'u8[512]{0}', space=vmem, size = 0x400, scoped, tag = 'output window, operand 0, single buffered']
    %8 = vsyncpa [#allocation3], 0
    %9 = vsyncpa [#allocation7], 0
    %10 = vsyncpa [#allocation5], 0
    %11 = vsyncpa [#allocation4], 0
    // Predicated region
    $region2: #{tpu_custom_call.1} parent=1 // pred_check
      _
    $region3: #{tpu_custom_call.1} parent=1 // pred_check_branch
      %13 = sbr.rel (0) target = $region5
    $region4: #{tpu_custom_call.1} parent=1 // pred_region
      %15 = vsyncadd [#allocation3], 0
      %s17 = sshll.u32 %s0, 4
      %s18 = int_to_ptr.hbm [resolvable:$true] %s17
      %s19 = sshll.u32 [#allocation2], 4
      %s20 = int_to_ptr.vmem [resolvable:$true] %s19
      %22 = dma.hbm_to_vmem [thread:$0]  %s18, 256, %s20, [#allocation3]
    $region5: #{tpu_custom_call.1} parent=1 // pred_fallthru
      _
    // Predicated region
    $region6: #{tpu_custom_call.1} parent=1 // pred_check
      _
    $region7: #{tpu_custom_call.1} parent=1 // pred_check_branch
      %24 = sbr.rel (0) target = $region9
    $region8: #{tpu_custom_call.1} parent=1 // pred_region
      %26 = vsyncadd [#allocation7], 0
      %s28 = sshll.u32 %s1, 4
      %s29 = int_to_ptr.hbm [resolvable:$true] %s28
      %s30 = sshll.u32 [#allocation6], 4
      %s31 = int_to_ptr.vmem [resolvable:$true] %s30
      %33 = dma.hbm_to_vmem [thread:$0]  %s29, 128, %s31, [#allocation7]
    $region9: #{tpu_custom_call.1} parent=1 // pred_fallthru
      _
    // Predicated region
    $region10: #{tpu_custom_call.1} parent=1 // pred_check
      _
    $region11: #{tpu_custom_call.1} parent=1 // pred_check_branch
      %35 = sbr.rel (0) target = $region13
    $region12: #{tpu_custom_call.1} parent=1 // pred_region
      %37 = vsyncadd [#allocation5], 0
      %s39 = sshll.u32 %s2, 4
      %s40 = int_to_ptr.vmem [resolvable:$true] %s39
      %42 = dma.vmem_to_smem %s40, 16, [#allocation8], [#allocation5]
    $region13: #{tpu_custom_call.1} parent=1 // pred_fallthru
      _
    // Predicated region
    $region14: #{tpu_custom_call.1} parent=1 // pred_check
      _
    $region15: #{tpu_custom_call.1} parent=1 // pred_check_branch
      %44 = sbr.rel (0) target = $region17
    $region16: #{tpu_custom_call.1} parent=1 // pred_region
      %46 = dma.done [#allocation3], 256
    $region17: #{tpu_custom_call.1} parent=1 // pred_fallthru
      _
    // Predicated region
    $region18: #{tpu_custom_call.1} parent=1 // pred_check
      _
    $region19: #{tpu_custom_call.1} parent=1 // pred_check_branch
      %48 = sbr.rel (0) target = $region21
    $region20: #{tpu_custom_call.1} parent=1 // pred_region
      %50 = dma.done [#allocation7], 128
    $region21: #{tpu_custom_call.1} parent=1 // pred_fallthru
      _
    // Predicated region
    $region22: #{tpu_custom_call.1} parent=1 // pred_check
      _
    $region23: #{tpu_custom_call.1} parent=1 // pred_check_branch
      %52 = sbr.rel (0) target = $region25
    $region24: #{tpu_custom_call.1} parent=1 // pred_region
      %54 = dma.done [#allocation5], 16
    $region25: #{tpu_custom_call.1} parent=1 // pred_fallthru
      _
    %55 = sfence
    %v56 = vld [vmem:[#allocation2] sm:$0xf]
    %v57 = vld [vmem:[#allocation2 + $0x8] sm:$0xf]
    %v58 = vld [vmem:[#allocation2] sm:$0xf0]
    %v59 = vld [vmem:[#allocation2 + $0x8] sm:$0xf0]
    %v60 = vld [vmem:[#allocation6] ss:$4 sm:$0x3]
    %s61 = scalar_lea.vmem [#allocation6], 1
    %v62 = vld [vmem:[%s61] ss:$4 sm:$0x3]
    %s63 = scalar_lea.vmem [#allocation6], 2
    %v64 = vld [vmem:[%s63] ss:$4 sm:$0x3]
    %s65 = scalar_lea.vmem [#allocation6], 3
    %v66 = vld [vmem:[%s65] ss:$4 sm:$0x3]
    %vm67 = vcmask 1047556
    %v68 = vsel %vm67, %v58, -inf
    %v69 = vrot.slane %v68, 4
    %v70 = vmax.f32 %v68, %v69
    %v71 = vrot.slane %v70, 2
    %v72 = vmax.f32 %v70, %v71
    %v73 = vrot.slane %v72, 1
    %v74 = vmax.f32 %v72, %v73
    %v75 = vsel %vm67, %v59, -inf
    %v76 = vrot.slane %v75, 4
    %v77 = vmax.f32 %v75, %v76
    %v78 = vrot.slane %v77, 2
    %v79 = vmax.f32 %v77, %v78
    %v80 = vrot.slane %v79, 1
    %v81 = vmax.f32 %v79, %v80
    %v82 = vxor.u32 %v74, 2147483648
    %v83 = vxor.u32 %v81, 2147483648
    %v84 = vmul.f32 %v82, 1.442695
    %v85 = vpow.pop %v84
    %v86 = vmul.f32 %v83, 1.442695
    %v87 = vpow.pop %v86
    %v88 = vadd.f32 %v85, 1.0
    %v89 = vadd.f32 %v87, 1.0
    %v90 = vrcp.pop %v88
    %v91 = vmul.f32 %v88, %v90
    %v92 = vsub.f32 1.0, %v91
    %v93 = vmul.f32 %v90, %v92
    %v94 = vadd.f32 %v90, %v93
    %vm95 = vweird.f32 %v88
    %vm96 = vweird.f32 %v90
    %vm97 = vmor %vm95, %vm96
    %v98 = vsel %vm97, %v90, %v94
    %v99 = vand.u32 2147483647, %v88
    %vm100 = vcmp.eq.f32.partialorder %v99, 8.507059e+37
    %v101 = vand.u32 %v88, 2147483648
    %v102 = vor.u32 1.1754944e-38, %v101
    %v103 = vsel %vm100, %v102, %v98
    %v104 = vmul.f32 1.0, %v103
    %v105 = vrcp.pop %v89
    %v106 = vmul.f32 %v89, %v105
    %v107 = vsub.f32 1.0, %v106
    %v108 = vmul.f32 %v105, %v107
    %v109 = vadd.f32 %v105, %v108
    %vm110 = vweird.f32 %v89
    %vm111 = vweird.f32 %v105
    %vm112 = vmor %vm110, %vm111
    %v113 = vsel %vm112, %v105, %v109
    %v114 = vand.u32 2147483647, %v89
    %vm115 = vcmp.eq.f32.partialorder %v114, 8.507059e+37
    %v116 = vand.u32 %v89, 2147483648
    %v117 = vor.u32 1.1754944e-38, %v116
    %v118 = vsel %vm115, %v117, %v113
    %v119 = vmul.f32 1.0, %v118
    %v122 = vrot.slane %v58, 4
    %v123 = vrot.slane %v59, 4
    %vm126 = vcmask 1043456
    %v127 = vsel %vm126, %v122, 0.0
    %v128 = vrot.slane %v127, 4
    %v129 = vadd.f32 %v127, %v128
    %v130 = vrot.slane %v129, 2
    %v131 = vadd.f32 %v129, %v130
    %v132 = vrot.slane %v131, 1
    %v133 = vadd.f32 %v131, %v132
    %v134 = vsel %vm126, %v123, 0.0
    %v135 = vrot.slane %v134, 4
    %v136 = vadd.f32 %v134, %v135
    %v137 = vrot.slane %v136, 2
    %v138 = vadd.f32 %v136, %v137
    %v139 = vrot.slane %v138, 1
    %v140 = vadd.f32 %v138, %v139
    %v141 = vrcp.pop %v133
    %v142 = vmul.f32 %v133, %v141
    %v143 = vsub.f32 1.0, %v142
    %v144 = vmul.f32 %v141, %v143
    %v145 = vadd.f32 %v141, %v144
    %vm146 = vweird.f32 %v133
    %vm147 = vweird.f32 %v141
    %vm148 = vmor %vm146, %vm147
    %v149 = vsel %vm148, %v141, %v145
    %v150 = vand.u32 2147483647, %v133
    %vm151 = vcmp.eq.f32.partialorder %v150, 8.507059e+37
    %v152 = vand.u32 %v133, 2147483648
    %v153 = vor.u32 1.1754944e-38, %v152
    %v154 = vsel %vm151, %v153, %v149
    %v155 = vmul.f32 1.0, %v154
    %v156 = vrcp.pop %v140
    %v157 = vmul.f32 %v140, %v156
    %v158 = vsub.f32 1.0, %v157
    %v159 = vmul.f32 %v156, %v158
    %v160 = vadd.f32 %v156, %v159
    %vm161 = vweird.f32 %v140
    %vm162 = vweird.f32 %v156
    %vm163 = vmor %vm161, %vm162
    %v164 = vsel %vm163, %v156, %v160
    %v165 = vand.u32 2147483647, %v140
    %vm166 = vcmp.eq.f32.partialorder %v165, 8.507059e+37
    %v167 = vand.u32 %v140, 2147483648
    %v168 = vor.u32 1.1754944e-38, %v167
    %v169 = vsel %vm166, %v168, %v164
    %v170 = vmul.f32 1.0, %v169
    %v171 = vmul.f32 %v58, %v155
    %v172 = vmul.f32 %v59, %v170
    %v173 = vadd.f32 %v104, %v119
    %174 = vadd.xlane.f32.xlu0 %v173
    %v175 = vpop.xlane.xlu0 %174
    %v176 = vrcp.pop %v175
    %v177 = vmul.f32 %v175, %v176
    %v178 = vsub.f32 1.0, %v177
    %v179 = vmul.f32 %v176, %v178
    %v180 = vadd.f32 %v176, %v179
    %vm181 = vweird.f32 %v175
    %vm182 = vweird.f32 %v176
    %vm183 = vmor %vm181, %vm182
    %v184 = vsel %vm183, %v176, %v180
    %v185 = vand.u32 2147483647, %v175
    %vm186 = vcmp.eq.f32.partialorder %v185, 8.507059e+37
    %v187 = vand.u32 %v175, 2147483648
    %v188 = vor.u32 1.1754944e-38, %v187
    %v189 = vsel %vm186, %v188, %v184
    %v190 = vmul.f32 1.0, %v189
    %v192 = vperm.slane %v64, 0
    %v193 = vperm.slane %v64, 1
    %v196 = vmul.f32 %v104, %v192
    %v197 = vmul.f32 %v119, %v193
    %vm198 = vcmask 1040384
    %v199 = vsel %vm198, %v196, 0.0
    %v200 = vsel %vm198, %v197, 0.0
    %v201 = vadd.f32 %v199, %v200
    %202 = vadd.xlane.f32.xlu0 %v201
    %v203 = vpop.xlane.xlu0 %202
    %v205 = vperm.slane %v66, 0
    %v206 = vperm.slane %v66, 1
    %v209 = vmul.f32 %v104, %v205
    %v210 = vmul.f32 %v119, %v206
    %v211 = vmul.f32 %v209, %v205
    %v212 = vmul.f32 %v210, %v206
    %v213 = vsel %vm198, %v211, 0.0
    %v214 = vsel %vm198, %v212, 0.0
    %v215 = vadd.f32 %v213, %v214
    %216 = vadd.xlane.f32.xlu0 %v215
    %v217 = vpop.xlane.xlu0 %216
    %v218 = vmul.f32 %v104, %v74
    %v219 = vmul.f32 %v119, %v81
    %v220 = vadd.f32 %v218, %v219
    %221 = vadd.xlane.f32.xlu0 %v220
    %v222 = vpop.xlane.xlu0 %221
    %v223 = vsub.f32 %v62, 1.0
    %v224 = vmul.f32 %v223, %v223
    %v226 = vperm.slane %v224, 0
    %v227 = vperm.slane %v224, 1
    %v230 = vsel %vm198, %v226, 0.0
    %v231 = vsel %vm198, %v227, 0.0
    %v232 = vadd.f32 %v230, %v231
    %233 = vadd.xlane.f32.xlu0 %v232
    %v234 = vpop.xlane.xlu0 %233
    %v235 = vsel %vm126, %v56, -inf
    %v236 = vrot.slane %v235, 4
    %v237 = vmax.f32 %v235, %v236
    %v238 = vrot.slane %v237, 2
    %v239 = vmax.f32 %v237, %v238
    %v240 = vrot.slane %v239, 1
    %v241 = vmax.f32 %v239, %v240
    %v242 = vsel %vm126, %v57, -inf
    %v243 = vrot.slane %v242, 4
    %v244 = vmax.f32 %v242, %v243
    %v245 = vrot.slane %v244, 2
    %v246 = vmax.f32 %v244, %v245
    %v247 = vrot.slane %v246, 1
    %v248 = vmax.f32 %v246, %v247
    %v249 = vadd.f32 %v241, %v248
    %250 = vadd.xlane.f32.xlu0 %v249
    %v251 = vpop.xlane.xlu0 %250
    %v252 = vsel %vm67, %v171, 0.0
    %v253 = vsel %vm67, %v172, 0.0
    %v254 = vadd.f32 %v252, %v253
    %255 = vadd.xlane.f32.xlu0 %v254
    %v256 = vpop.xlane.xlu0 %255
    %v257 = vmul.f32 %v203, %v190
    %v258 = vsub.f32 0.0, %v60
    %v260 = vperm.slane %v257, 0
    %v262 = vadd.f32 %v258, %v260
    %v263 = vadd.f32 %v262, 0.02
    %v264 = vmax.f32 %v263, 0.0
    %v266 = vperm.slane %v264, 0
    %v267 = vperm.slane %v264, 1
    %v270 = vsel %vm198, %v266, 0.0
    %v271 = vsel %vm198, %v267, 0.0
    %v272 = vadd.f32 %v270, %v271
    %273 = vadd.xlane.f32.xlu0 %v272
    %v274 = vpop.xlane.xlu0 %273
    %v275 = vrcp.pop 256.0
    %v276 = vmul.f32 256.0, %v275
    %v277 = vsub.f32 1.0, %v276
    %v278 = vmul.f32 %v275, %v277
    %v279 = vadd.f32 %v275, %v278
    %vm280 = vweird.f32 %v275
    %v281 = vsel %vm280, %v275, %v279
    %v282 = vmul.f32 %v274, %v281
    %v283 = vadd.f32 %v257, %v282
    %v284 = vmul.f32 %v234, %v281
    %v285 = vmul.f32 %v217, %v190
    %v286 = vadd.f32 %v284, %v285
    %v287 = vrcp.pop %v256
    %v288 = vmul.f32 %v256, %v287
    %v289 = vsub.f32 1.0, %v288
    %v290 = vmul.f32 %v287, %v289
    %v291 = vadd.f32 %v287, %v290
    %vm292 = vweird.f32 %v256
    %vm293 = vweird.f32 %v287
    %vm294 = vmor %vm292, %vm293
    %v295 = vsel %vm294, %v287, %v291
    %v296 = vand.u32 2147483647, %v256
    %vm297 = vcmp.eq.f32.partialorder %v296, 8.507059e+37
    %v298 = vand.u32 %v256, 2147483648
    %v299 = vor.u32 1.1754944e-38, %v298
    %v300 = vsel %vm297, %v299, %v295
    %v301 = vmul.f32 1.0, %v300
    %v302 = vmul.f32 %v171, %v171
    %v303 = vmul.f32 %v172, %v172
    %v304 = vmul.f32 %v302, %v301
    %v305 = vmul.f32 %v303, %v301
    %v308 = vrot.slane %v304, 4
    %v309 = vrot.slane %v305, 4
    %v312 = vsel %vm126, %v308, 0.0
    %v313 = vrot.slane %v312, 4
    %v314 = vadd.f32 %v312, %v313
    %v315 = vrot.slane %v314, 2
    %v316 = vadd.f32 %v314, %v315
    %v317 = vrot.slane %v316, 1
    %v318 = vadd.f32 %v316, %v317
    %v319 = vsel %vm126, %v309, 0.0
    %v320 = vrot.slane %v319, 4
    %v321 = vadd.f32 %v319, %v320
    %v322 = vrot.slane %v321, 2
    %v323 = vadd.f32 %v321, %v322
    %v324 = vrot.slane %v323, 1
    %v325 = vadd.f32 %v323, %v324
    %v326 = vrcp.pop %v318
    %v327 = vmul.f32 %v318, %v326
    %v328 = vsub.f32 1.0, %v327
    %v329 = vmul.f32 %v326, %v328
    %v330 = vadd.f32 %v326, %v329
    %vm331 = vweird.f32 %v318
    %vm332 = vweird.f32 %v326
    %vm333 = vmor %vm331, %vm332
    %v334 = vsel %vm333, %v326, %v330
    %v335 = vand.u32 2147483647, %v318
    %vm336 = vcmp.eq.f32.partialorder %v335, 8.507059e+37
    %v337 = vand.u32 %v318, 2147483648
    %v338 = vor.u32 1.1754944e-38, %v337
    %v339 = vsel %vm336, %v338, %v334
    %v340 = vmul.f32 1.0, %v339
    %v341 = vrcp.pop %v325
    %v342 = vmul.f32 %v325, %v341
    %v343 = vsub.f32 1.0, %v342
    %v344 = vmul.f32 %v341, %v343
    %v345 = vadd.f32 %v341, %v344
    %vm346 = vweird.f32 %v325
    %vm347 = vweird.f32 %v341
    %vm348 = vmor %vm346, %vm347
    %v349 = vsel %vm348, %v341, %v345
    %v350 = vand.u32 2147483647, %v325
    %vm351 = vcmp.eq.f32.partialorder %v350, 8.507059e+37
    %v352 = vand.u32 %v325, 2147483648
    %v353 = vor.u32 1.1754944e-38, %v352
    %v354 = vsel %vm351, %v353, %v349
    %v355 = vmul.f32 1.0, %v354
    %v356 = vmul.f32 %v304, %v340
    %v357 = vmul.f32 %v305, %v355
    %v358 = vlog2.pop %v171
    %v359 = vmul.f32 %v358, 0.6931472
    %v360 = vlog2.pop %v172
    %v361 = vmul.f32 %v360, 0.6931472
    %v362 = vlog2.pop %v256
    %v363 = vmul.f32 %v362, 0.6931472
    %v364 = vsub.f32 %v359, %v363
    %v365 = vsub.f32 %v361, %v363
    %v366 = vlog2.pop %v318
    %v367 = vmul.f32 %v366, 0.6931472
    %v368 = vlog2.pop %v325
    %v369 = vmul.f32 %v368, 0.6931472
    %v370 = vsub.f32 %v364, %v367
    %v371 = vsub.f32 %v365, %v369
    %v372 = vmul.f32 %v356, %v370
    %v373 = vmul.f32 %v357, %v371
    %v374 = vsel %vm67, %v372, 0.0
    %v375 = vsel %vm67, %v373, 0.0
    %v376 = vadd.f32 %v374, %v375
    %377 = vadd.xlane.f32.xlu0 %v376
    %v378 = vpop.xlane.xlu0 %377
    %v380 = vrot.slane %v378, 4
    %v382 = vsel %vm126, %v380, 0.0
    %v383 = vrot.slane %v382, 4
    %v384 = vadd.f32 %v382, %v383
    %v385 = vrot.slane %v384, 2
    %v386 = vadd.f32 %v384, %v385
    %v387 = vrot.slane %v386, 1
    %v388 = vadd.f32 %v386, %v387
    %v389 = vmul.f32 %v251, %v281
    %v390 = vmul.f32 %v222, %v190
    %v391 = vsub.f32 0.0, %v389
    %v392 = vadd.f32 %v391, %v390
    %v393 = vxor.u32 %v392, 2147483648
    %v394 = vmul.f32 %v393, 1.442695
    %v395 = vpow.pop %v394
    %v396 = vadd.f32 %v395, 1.0
    %v397 = vrcp.pop %v396
    %v398 = vmul.f32 %v396, %v397
    %v399 = vsub.f32 1.0, %v398
    %v400 = vmul.f32 %v397, %v399
    %v401 = vadd.f32 %v397, %v400
    %vm402 = vweird.f32 %v396
    %vm403 = vweird.f32 %v397
    %vm404 = vmor %vm402, %vm403
    %v405 = vsel %vm404, %v397, %v401
    %v406 = vand.u32 2147483647, %v396
    %vm407 = vcmp.eq.f32.partialorder %v406, 8.507059e+37
    %v408 = vand.u32 %v396, 2147483648
    %v409 = vor.u32 1.1754944e-38, %v408
    %v410 = vsel %vm407, %v409, %v405
    %v411 = vmul.f32 1.0, %v410
    %v412 = vlog2.pop %v411
    %v413 = vmul.f32 %v412, 0.6931472
    %v414 = vsub.f32 0.0, %v413
    %v415 = vadd.f32 %v414, %v388
    %s416 = sld [smem:[#allocation8]]
    %v417 = vstv %s416
    %vm418 = vcmp.ne.f32.partialorder %v417, 0.0
    %v419 = vsel %vm418, %v417, 1.0
    %v420 = vrcp.pop %v419
    %v421 = vmul.f32 %v419, %v420
    %v422 = vsub.f32 1.0, %v421
    %v423 = vmul.f32 %v420, %v422
    %v424 = vadd.f32 %v420, %v423
    %vm425 = vweird.f32 %v419
    %vm426 = vweird.f32 %v420
    %vm427 = vmor %vm425, %vm426
    %v428 = vsel %vm427, %v420, %v424
    %v429 = vand.u32 2147483647, %v419
    %vm430 = vcmp.eq.f32.partialorder %v429, 8.507059e+37
    %v431 = vand.u32 %v419, 2147483648
    %v432 = vor.u32 1.1754944e-38, %v431
    %v433 = vsel %vm430, %v432, %v428
    %v434 = vmul.f32 %v283, %v433
    %v435 = vrcp.pop 2.0
    %v436 = vmul.f32 2.0, %v435
    %v437 = vsub.f32 1.0, %v436
    %v438 = vmul.f32 %v435, %v437
    %v439 = vadd.f32 %v435, %v438
    %vm440 = vweird.f32 %v435
    %v441 = vsel %vm440, %v435, %v439
    %v442 = vmul.f32 %v434, %v441
    %v443 = vmul.f32 %v442, 1.442695
    %v444 = vpow.pop %v443
    %v445 = vsel %vm418, %v444, 0.0
    %s446 = sld [smem:[#allocation8 + $0x1]]
    %v447 = vstv %s446
    %vm448 = vcmp.ne.f32.partialorder %v447, 0.0
    %v449 = vsel %vm448, %v447, 1.0
    %v450 = vrcp.pop %v449
    %v451 = vmul.f32 %v449, %v450
    %v452 = vsub.f32 1.0, %v451
    %v453 = vmul.f32 %v450, %v452
    %v454 = vadd.f32 %v450, %v453
    %vm455 = vweird.f32 %v449
    %vm456 = vweird.f32 %v450
    %vm457 = vmor %vm455, %vm456
    %v458 = vsel %vm457, %v450, %v454
    %v459 = vand.u32 2147483647, %v449
    %vm460 = vcmp.eq.f32.partialorder %v459, 8.507059e+37
    %v461 = vand.u32 %v449, 2147483648
    %v462 = vor.u32 1.1754944e-38, %v461
    %v463 = vsel %vm460, %v462, %v458
    %v464 = vmul.f32 %v286, %v463
    %v465 = vmul.f32 %v464, %v441
    %v466 = vmul.f32 %v465, 1.442695
    %v467 = vpow.pop %v466
    %v468 = vsel %vm448, %v467, 0.0
    %s469 = sld [smem:[#allocation8 + $0x2]]
    %v470 = vstv %s469
    %vm471 = vcmp.ne.f32.partialorder %v470, 0.0
    %v472 = vsel %vm471, %v470, 1.0
    %v473 = vrcp.pop %v472
    %v474 = vmul.f32 %v472, %v473
    %v475 = vsub.f32 1.0, %v474
    %v476 = vmul.f32 %v473, %v475
    %v477 = vadd.f32 %v473, %v476
    %vm478 = vweird.f32 %v472
    %vm479 = vweird.f32 %v473
    %vm480 = vmor %vm478, %vm479
    %v481 = vsel %vm480, %v473, %v477
    %v482 = vand.u32 2147483647, %v472
    %vm483 = vcmp.eq.f32.partialorder %v482, 8.507059e+37
    %v484 = vand.u32 %v472, 2147483648
    %v485 = vor.u32 1.1754944e-38, %v484
    %v486 = vsel %vm483, %v485, %v481
    %v487 = vmul.f32 %v415, %v486
    %v488 = vmul.f32 %v487, %v441
    %v489 = vmul.f32 %v488, 1.442695
    %v490 = vpow.pop %v489
    %v491 = vsel %vm471, %v490, 0.0
    %v492 = vadd.f32 %v445, %v468
    %v493 = vadd.f32 %v492, %v491
    %v494 = vmul.f32 %v445, %v283
    %v495 = vmul.f32 %v468, %v286
    %v496 = vadd.f32 %v494, %v495
    %v497 = vmul.f32 %v491, %v415
    %v498 = vadd.f32 %v496, %v497
    %v499 = vrcp.pop %v493
    %v500 = vmul.f32 %v493, %v499
    %v501 = vsub.f32 1.0, %v500
    %v502 = vmul.f32 %v499, %v501
    %v503 = vadd.f32 %v499, %v502
    %vm504 = vweird.f32 %v493
    %vm505 = vweird.f32 %v499
    %vm506 = vmor %vm504, %vm505
    %v507 = vsel %vm506, %v499, %v503
    %v508 = vand.u32 2147483647, %v493
    %vm509 = vcmp.eq.f32.partialorder %v508, 8.507059e+37
    %v510 = vand.u32 %v493, 2147483648
    %v511 = vor.u32 1.1754944e-38, %v510
    %v512 = vsel %vm509, %v511, %v507
    %v513 = vmul.f32 %v498, %v512
    %v514 = vlaneseq
    %v515 = vand.u32 %v514, 127
    %vm516 = vcmp.eq.s32.totalorder %v515, 0
    %v517 = vsel %vm516, %v513, 0.0
    %vm518 = vcmp.eq.s32.totalorder %v515, 1
    %v519 = vsel %vm518, %v283, %v517
    %vm520 = vcmp.eq.s32.totalorder %v515, 2
    %v521 = vsel %vm520, %v282, %v519
    %vm522 = vcmp.eq.s32.totalorder %v515, 3
    %v523 = vsel %vm522, %v257, %v521
    %vm524 = vcmp.eq.s32.totalorder %v515, 4
    %v525 = vsel %vm524, %v286, %v523
    %vm526 = vcmp.eq.s32.totalorder %v515, 5
    %v527 = vsel %vm526, %v284, %v525
    %vm528 = vcmp.eq.s32.totalorder %v515, 6
    %v529 = vsel %vm528, %v285, %v527
    %vm530 = vcmp.eq.s32.totalorder %v515, 7
    %v531 = vsel %vm530, %v415, %v529
    %vm532 = vcmp.eq.s32.totalorder %v515, 8
    %v533 = vsel %vm532, %v389, %v531
    %vm534 = vcmp.eq.s32.totalorder %v515, 9
    %v535 = vsel %vm534, %v390, %v533
    %536 = vst [vmem:[#allocation9] sm:$0x1] %v535
    // Predicated region
    $region26: #{tpu_custom_call.1} parent=1 // pred_check
      _
    $region27: #{tpu_custom_call.1} parent=1 // pred_check_branch
      %538 = sbr.rel (0) target = $region29
    $region28: #{tpu_custom_call.1} parent=1 // pred_region
      %540 = vsyncadd [#allocation4], 0
      %s542 = sshll.u32 [#allocation9], 4
      %s543 = int_to_ptr.vmem [resolvable:$true] %s542
      %s544 = sshll.u32 %s3, 4
      %s545 = int_to_ptr.hbm [resolvable:$true] %s544
      %547 = dma.vmem_to_hbm [thread:$0]  %s543, 16, %s545, [#allocation4]
    $region29: #{tpu_custom_call.1} parent=1 // pred_fallthru
      _
    // Predicated region
    $region30: #{tpu_custom_call.1} parent=1 // pred_check
      _
    $region31: #{tpu_custom_call.1} parent=1 // pred_check_branch
      %549 = sbr.rel (0) target = $region33
    $region32: #{tpu_custom_call.1} parent=1 // pred_region
      %551 = dma.done [#allocation4], 16
    $region33: #{tpu_custom_call.1} parent=1 // pred_fallthru
      _
    %552 = vsyncpa [#allocation3], 1
    %553 = vsyncpa [#allocation7], 1
    %554 = vsyncpa [#allocation4], 1
    %555 = vsyncpa [#allocation5], 1

</llo_original>
